<compile_context>
chip_gen: v5e
topology: v5e:2x2
jax: 0.10.0
libtpu: 0.0.40
codegen_flags: <defaults>
</compile_context>

<pallas_src>
import functools

import jax
import jax.numpy as jnp
from jax.experimental import pallas as pl
from jax.experimental.pallas import tpu as pltpu


def _round_up(n, m):
    return ((n + m - 1) // m) * m


# --------------------------------------------------------------------------
# Kernel: fused tanh dense stack + single fused (edge|node) linear head.
# refs = [x, (w, b) * n_hidden, w_head, b_head, out]
# --------------------------------------------------------------------------
def _generator_kernel(n_hidden, *refs):
    h = refs[0][...]                      # bf16 (tb, z)
    idx = 1
    for _ in range(n_hidden):
        w = refs[idx][...]                # bf16 (din, dout_p)
        b = refs[idx + 1][...]            # f32  (1, dout_p)
        idx += 2
        h = jnp.tanh(jnp.dot(h, w, preferred_element_type=jnp.float32) + b)
        h = h.astype(jnp.bfloat16)        # bf16 operands for the next MXU pass
    w_head = refs[idx][...]               # bf16 (last_p, head_p)
    b_head = refs[idx + 1][...]           # f32  (1, head_p)
    out_ref = refs[idx + 2]
    out_ref[...] = jnp.dot(h, w_head, preferred_element_type=jnp.float32) + b_head


# --------------------------------------------------------------------------
# Parameter init (PyTorch nn.Linear-style uniform +-1/sqrt(fan_in)).
# Weights stored (in_features, out_features) so y = x @ W + b.
# --------------------------------------------------------------------------
def init_generator_params(key, z_dim, conv_dims, vertexes, edges, nodes):
    dims = [z_dim] + list(conv_dims)
    hidden_ws, hidden_bs = [], []
    for din, dout in zip(dims[:-1], dims[1:]):
        key, k1, k2 = jax.random.split(key, 3)
        bound = 1.0 / (din ** 0.5)
        hidden_ws.append(jax.random.uniform(k1, (din, dout), jnp.float32, -bound, bound))
        hidden_bs.append(jax.random.uniform(k2, (1, dout), jnp.float32, -bound, bound))
    last = conv_dims[-1]
    bound = 1.0 / (last ** 0.5)
    key, k1, k2, k3, k4 = jax.random.split(key, 5)
    we = jax.random.uniform(k1, (last, edges * vertexes * vertexes), jnp.float32, -bound, bound)
    be = jax.random.uniform(k2, (1, edges * vertexes * vertexes), jnp.float32, -bound, bound)
    wn = jax.random.uniform(k3, (last, vertexes * nodes), jnp.float32, -bound, bound)
    bn = jax.random.uniform(k4, (1, vertexes * nodes), jnp.float32, -bound, bound)
    return hidden_ws, hidden_bs, we, be, wn, bn


# --------------------------------------------------------------------------
# One-time parameter prep:
#   * fold (E + E^T)/2 and permute(0,2,3,1) into the edge head (exact),
#   * fuse edge head + node head into ONE output matmul,
#   * pad output dims to 128-lane multiples, cast matmul weights to bf16.
# --------------------------------------------------------------------------
def prepare_generator_params(params, *, z_dim, vertexes, edges, nodes):
    hidden_ws, hidden_bs, we, be, wn, bn = params
    E, V, N = edges, vertexes, nodes
    last = hidden_ws[-1].shape[1] if hidden_ws else z_dim

    # Edge head: column (e,i,j) -> 0.5*(col(e,i,j) + col(e,j,i)), then reorder
    # columns from (E,V,V) to (V,V,E) flattening (== final permute(0,2,3,1)).
    we4 = we.reshape(last, E, V, V)
    we_sym = 0.5 * (we4 + jnp.swapaxes(we4, 2, 3))
    we_p = jnp.transpose(we_sym, (0, 2, 3, 1)).reshape(last, V * V * E)
    be4 = be.reshape(1, E, V, V)
    be_sym = 0.5 * (be4 + jnp.swapaxes(be4, 2, 3))
    be_p = jnp.transpose(be_sym, (0, 2, 3, 1)).reshape(1, V * V * E)

    # Fuse both heads into a single matmul: columns [0, V*V*E) are edge
    # logits, columns [V*V*E, V*V*E + V*N) are node logits.
    w_head = jnp.concatenate([we_p, wn], axis=1)
    b_head = jnp.concatenate([be_p, bn], axis=1)

    def pad2(a, rows, cols, dtype):
        a = jnp.pad(a, ((0, rows - a.shape[0]), (0, cols - a.shape[1])))
        return a.astype(dtype)

    dims = [z_dim] + [w.shape[1] for w in hidden_ws]
    # Input width (z_dim) stays unpadded; hidden widths pad to 128 lanes.
    dims_p = [z_dim] + [_round_up(d, 128) for d in dims[1:]]
    ws_pad, bs_pad = [], []
    for i, (w, b) in enumerate(zip(hidden_ws, hidden_bs)):
        ws_pad.append(pad2(w, dims_p[i], dims_p[i + 1], jnp.bfloat16))
        bs_pad.append(pad2(b, 1, dims_p[i + 1], jnp.float32))
    last_p = dims_p[-1]
    head_p = _round_up(V * V * E + V * N, 128)
    w_head_pad = pad2(w_head, last_p, head_p, jnp.bfloat16)
    b_head_pad = pad2(b_head, 1, head_p, jnp.float32)
    return ws_pad, bs_pad, w_head_pad, b_head_pad


# --------------------------------------------------------------------------
# Forward wrapper.
# --------------------------------------------------------------------------
def generator_forward(x, prepped, *, vertexes, edges, nodes):
    ws_p, bs_p, w_head, b_head = prepped
    n_hidden = len(ws_p)
    V, E, N = vertexes, edges, nodes
    batch, z = x.shape
    head_p = w_head.shape[1]

    # Batch tile: biggest reasonable tile (weights are VMEM-resident so large
    # tiles amortize per-step pipeline overhead); keep >=2 grid steps when the
    # batch allows so the "parallel" axis shards across v7x's two TensorCores.
    tb = min(512, _round_up(batch, 16))
    if batch > 16 and _round_up(batch, tb) // tb < 2:
        tb = _round_up((batch + 1) // 2, 16)
    bp = _round_up(batch, tb)

    # bf16 input halves the per-step x DMA; zero-padding is exact.
    xp = jnp.pad(x, ((0, bp - batch), (0, 0))).astype(jnp.bfloat16)

    inputs = [xp]
    in_specs = [pl.BlockSpec((tb, z), lambda i: (i, 0))]
    for w, b in zip(ws_p, bs_p):
        inputs += [w, b]
        in_specs += [pl.BlockSpec(w.shape, lambda i: (0, 0)),
                     pl.BlockSpec(b.shape, lambda i: (0, 0))]
    inputs += [w_head, b_head]
    in_specs += [pl.BlockSpec(w_head.shape, lambda i: (0, 0)),
                 pl.BlockSpec(b_head.shape, lambda i: (0, 0))]

    # Explicit scoped-VMEM budget: 2x weights (double-buffer-safe even though
    # their block index never changes) + double-buffered x/out tiles +
    # intermediates, clamped to [16 MiB, 60 MiB].
    def _nbytes(a):
        return a.size * a.dtype.itemsize

    weight_bytes = sum(_nbytes(a) for a in inputs[1:])
    io_bytes = tb * z * 2 + tb * head_p * 4
    widths = [z] + [w.shape[1] for w in ws_p] + [head_p]
    interm_bytes = 2 * tb * max(widths) * 4
    budget = 2 * weight_bytes + 2 * io_bytes + interm_bytes
    vmem_limit = int(min(60 << 20, max(2 * budget + (8 << 20), 16 << 20)))

    out_flat = pl.pallas_call(
        functools.partial(_generator_kernel, n_hidden),
        grid=(bp // tb,),
        out_shape=jax.ShapeDtypeStruct((bp, head_p), jnp.float32),
        in_specs=in_specs,
        out_specs=pl.BlockSpec((tb, head_p), lambda i: (i, 0)),
        compiler_params=pltpu.CompilerParams(
            dimension_semantics=("parallel",),
            vmem_limit_bytes=vmem_limit),
    )(*inputs)

    # Slice off lane/batch padding; edge logits come out already symmetric and
    # in (V, V, E) order, node logits follow in the same fused output slab.
    edges_logits = out_flat[:batch, : V * V * E].reshape(batch, V, V, E)
    nodes_logits = out_flat[:batch, V * V * E: V * V * E + V * N].reshape(batch, V, N)
    # nn.Dropout: inference/eval semantics (identity).
    # TODO(synk): training-mode dropout (random masking via pltpu.prng_*) not implemented.
    return edges_logits, nodes_logits


# --------------------------------------------------------------------------
# Pure-JAX f32 reference (unpadded, unfolded, unfused params).
# --------------------------------------------------------------------------
def _reference_forward(x, params, *, vertexes, edges, nodes):
    hidden_ws, hidden_bs, we, be, wn, bn = params
    h = x
    for w, b in zip(hidden_ws, hidden_bs):
        h = jnp.tanh(h @ w + b)
    e = (h @ we + be).reshape(-1, edges, vertexes, vertexes)
    e = 0.5 * (e + jnp.transpose(e, (0, 1, 3, 2)))
    e = jnp.transpose(e, (0, 2, 3, 1))
    n = (h @ wn + bn).reshape(-1, vertexes, nodes)
    return e, n


if __name__ == "__main__":
    batch = 2
    z_dim = 16
    conv_dims = [32, 64]
    vertexes = 8
    edges = 4
    nodes = 5
    dropout_rate = 0.0  # eval-mode dropout is identity regardless

    key = jax.random.PRNGKey(0)
    key, xkey, pkey = jax.random.split(key, 3)
    x = jax.random.normal(xkey, (batch, z_dim), jnp.float32)
    params = init_generator_params(pkey, z_dim, conv_dims, vertexes, edges, nodes)

    # One-time weight prep (fold symmetrize+permute, fuse heads, pad, bf16).
    prepped = prepare_generator_params(
        params, z_dim=z_dim, vertexes=vertexes, edges=edges, nodes=nodes)
    prepped = jax.tree_util.tree_map(jax.block_until_ready, prepped)

    fwd = jax.jit(functools.partial(
        generator_forward, vertexes=vertexes, edges=edges, nodes=nodes))
    edges_logits, nodes_logits = fwd(x, prepped)
    jax.block_until_ready((edges_logits, nodes_logits))

    # Sanity check vs. f32 pure-JAX reference (bf16 matmul operands => relaxed tol).
    e_ref, n_ref = _reference_forward(
        x, params, vertexes=vertexes, edges=edges, nodes=nodes)
    assert edges_logits.shape == (batch, vertexes, vertexes, edges)
    assert nodes_logits.shape == (batch, vertexes, nodes)
    assert jnp.allclose(edges_logits, e_ref, atol=2e-2, rtol=2e-2)
    assert jnp.allclose(nodes_logits, n_ref, atol=2e-2, rtol=2e-2)

    print("KERNEL_OK")
</pallas_src>

<mosaic_0001>
module attributes {stable_mosaic.version = 11 : i64} {
  func.func @_generator_kernel(%arg0: i32, %arg1: memref<16x16xbf16, #tpu.memory_space<vmem>>, %arg2: memref<16x128xbf16, #tpu.memory_space<vmem>>, %arg3: memref<1x128xf32, #tpu.memory_space<vmem>>, %arg4: memref<128x128xbf16, #tpu.memory_space<vmem>>, %arg5: memref<1x128xf32, #tpu.memory_space<vmem>>, %arg6: memref<128x384xbf16, #tpu.memory_space<vmem>>, %arg7: memref<1x384xf32, #tpu.memory_space<vmem>>, %arg8: memref<16x384xf32, #tpu.memory_space<vmem>>) attributes {dimension_semantics = [#tpu.dimension_semantics<parallel>], iteration_bounds = array<i64: 1>, scalar_prefetch = 0 : i64, scratch_operands = 0 : i64, tpu.core_type = #tpu.core_type<tc>, window_params = [{transform_indices = @transform_0, window_bounds = array<i64: 16, 16>}, {pipeline_mode = #tpu.pipeline_mode<synchronous>, transform_indices = @transform_1, window_bounds = array<i64: 16, 128>}, {pipeline_mode = #tpu.pipeline_mode<synchronous>, transform_indices = @transform_2, window_bounds = array<i64: 1, 128>}, {pipeline_mode = #tpu.pipeline_mode<synchronous>, transform_indices = @transform_3, window_bounds = array<i64: 128, 128>}, {pipeline_mode = #tpu.pipeline_mode<synchronous>, transform_indices = @transform_4, window_bounds = array<i64: 1, 128>}, {pipeline_mode = #tpu.pipeline_mode<synchronous>, transform_indices = @transform_5, window_bounds = array<i64: 128, 384>}, {pipeline_mode = #tpu.pipeline_mode<synchronous>, transform_indices = @transform_6, window_bounds = array<i64: 1, 384>}, {transform_indices = @transform_7, window_bounds = array<i64: 16, 384>}]} {
    %c0 = arith.constant 0 : index
    %c0_0 = arith.constant 0 : index
    %0 = vector.load %arg1[%c0, %c0_0] : memref<16x16xbf16, #tpu.memory_space<vmem>>, vector<16x16xbf16>
    %c0_1 = arith.constant 0 : index
    %c0_2 = arith.constant 0 : index
    %1 = vector.load %arg2[%c0_1, %c0_2] : memref<16x128xbf16, #tpu.memory_space<vmem>>, vector<16x128xbf16>
    %c0_3 = arith.constant 0 : index
    %c0_4 = arith.constant 0 : index
    %2 = vector.load %arg3[%c0_3, %c0_4] : memref<1x128xf32, #tpu.memory_space<vmem>>, vector<1x128xf32>
    %cst = arith.constant dense<0.000000e+00> : vector<16x128xf32>
    %3 = tpu.matmul %0, %1, %cst {dimension_numbers = #tpu.dot_dimension_numbers<[1], [0], [0], [1], [0, 0, 1, 1], [], []>} : vector<16x16xbf16>, vector<16x128xbf16>, vector<16x128xf32> -> vector<16x128xf32>
    %4 = vector.broadcast %2 : vector<1x128xf32> to vector<16x128xf32>
    %5 = arith.addf %3, %4 : vector<16x128xf32>
    %6 = math.tanh %5 : vector<16x128xf32>
    %7 = arith.truncf %6 : vector<16x128xf32> to vector<16x128xbf16>
    %c0_5 = arith.constant 0 : index
    %c0_6 = arith.constant 0 : index
    %8 = vector.load %arg4[%c0_5, %c0_6] : memref<128x128xbf16, #tpu.memory_space<vmem>>, vector<128x128xbf16>
    %c0_7 = arith.constant 0 : index
    %c0_8 = arith.constant 0 : index
    %9 = vector.load %arg5[%c0_7, %c0_8] : memref<1x128xf32, #tpu.memory_space<vmem>>, vector<1x128xf32>
    %cst_9 = arith.constant dense<0.000000e+00> : vector<16x128xf32>
    %10 = tpu.matmul %7, %8, %cst_9 {dimension_numbers = #tpu.dot_dimension_numbers<[1], [0], [0], [1], [0, 0, 1, 1], [], []>} : vector<16x128xbf16>, vector<128x128xbf16>, vector<16x128xf32> -> vector<16x128xf32>
    %11 = vector.broadcast %9 : vector<1x128xf32> to vector<16x128xf32>
    %12 = arith.addf %10, %11 : vector<16x128xf32>
    %13 = math.tanh %12 : vector<16x128xf32>
    %14 = arith.truncf %13 : vector<16x128xf32> to vector<16x128xbf16>
    %c0_10 = arith.constant 0 : index
    %c0_11 = arith.constant 0 : index
    %15 = vector.load %arg6[%c0_10, %c0_11] : memref<128x384xbf16, #tpu.memory_space<vmem>>, vector<128x384xbf16>
    %c0_12 = arith.constant 0 : index
    %c0_13 = arith.constant 0 : index
    %16 = vector.load %arg7[%c0_12, %c0_13] : memref<1x384xf32, #tpu.memory_space<vmem>>, vector<1x384xf32>
    %cst_14 = arith.constant dense<0.000000e+00> : vector<16x384xf32>
    %17 = tpu.matmul %14, %15, %cst_14 {dimension_numbers = #tpu.dot_dimension_numbers<[1], [0], [0], [1], [0, 0, 1, 1], [], []>} : vector<16x128xbf16>, vector<128x384xbf16>, vector<16x384xf32> -> vector<16x384xf32>
    %18 = vector.broadcast %16 : vector<1x384xf32> to vector<16x384xf32>
    %19 = arith.addf %17, %18 : vector<16x384xf32>
    %c0_15 = arith.constant 0 : index
    %c0_16 = arith.constant 0 : index
    %20 = vector.load %arg8[%c0_15, %c0_16] : memref<16x384xf32, #tpu.memory_space<vmem>>, vector<16x384xf32>
    tpu.vector_store %arg8[%c0_15, %c0_16], %19 {strides = array<i32>} : memref<16x384xf32, #tpu.memory_space<vmem>>, vector<16x384xf32>,
    return
  }
  func.func @transform_0(%arg0: i32) -> (i32, i32) {
    %c0_i32 = arith.constant 0 : i32
    %c0_i32_0 = arith.constant 0 : i32
    return %arg0, %c0_i32 : i32, i32
  }
  func.func @transform_1(%arg0: i32) -> (i32, i32) {
    %c0_i32 = arith.constant 0 : i32
    %c0_i32_0 = arith.constant 0 : i32
    %c0_i32_1 = arith.constant 0 : i32
    return %c0_i32, %c0_i32_0 : i32, i32
  }
  func.func @transform_2(%arg0: i32) -> (i32, i32) {
    %c0_i32 = arith.constant 0 : i32
    %c0_i32_0 = arith.constant 0 : i32
    %c0_i32_1 = arith.constant 0 : i32
    return %c0_i32, %c0_i32_0 : i32, i32
  }
  func.func @transform_3(%arg0: i32) -> (i32, i32) {
    %c0_i32 = arith.constant 0 : i32
    %c0_i32_0 = arith.constant 0 : i32
    %c0_i32_1 = arith.constant 0 : i32
    return %c0_i32, %c0_i32_0 : i32, i32
  }
  func.func @transform_4(%arg0: i32) -> (i32, i32) {
    %c0_i32 = arith.constant 0 : i32
    %c0_i32_0 = arith.constant 0 : i32
    %c0_i32_1 = arith.constant 0 : i32
    return %c0_i32, %c0_i32_0 : i32, i32
  }
  func.func @transform_5(%arg0: i32) -> (i32, i32) {
    %c0_i32 = arith.constant 0 : i32
    %c0_i32_0 = arith.constant 0 : i32
    %c0_i32_1 = arith.constant 0 : i32
    return %c0_i32, %c0_i32_0 : i32, i32
  }
  func.func @transform_6(%arg0: i32) -> (i32, i32) {
    %c0_i32 = arith.constant 0 : i32
    %c0_i32_0 = arith.constant 0 : i32
    %c0_i32_1 = arith.constant 0 : i32
    return %c0_i32, %c0_i32_0 : i32, i32
  }
  func.func @transform_7(%arg0: i32) -> (i32, i32) {
    %c0_i32 = arith.constant 0 : i32
    %c0_i32_0 = arith.constant 0 : i32
    return %arg0, %c0_i32 : i32, i32
  }
}

</mosaic_0001>

<llo_original>
// kernel: generator_forward.1
$region0: #{generator_forward.1}
  #allocation0 [shape = 'u32[]', space=smem, size = 0x4, offset = 0x4, fixed_abs, tag = 'smem constant byte address 0x4 - core index']
  #allocation1 [shape = 'u32[72,128]{1,0:T(1,128)}', space=vmem, size = 0x9000, scoped, tag = 'internal scratch']
  %s0 = inlined_call_operand.vmem [shape: bf16[16,16], index: 0, kind: input, shape index: {}]
  %s1 = inlined_call_operand.vmem [shape: bf16[16,128], index: 1, kind: input, shape index: {}]
  %s2 = inlined_call_operand.vmem [shape: f32[1,128], index: 2, kind: input, shape index: {}]
  %s3 = inlined_call_operand.hbm [shape: bf16[128,128], index: 3, kind: input, shape index: {}]
  %s4 = inlined_call_operand.vmem [shape: f32[1,128], index: 4, kind: input, shape index: {}]
  %s5 = inlined_call_operand.hbm [shape: bf16[128,384], index: 5, kind: input, shape index: {}]
  %s6 = inlined_call_operand.vmem [shape: f32[1,384], index: 6, kind: input, shape index: {}]
  %s7 = inlined_call_operand.vmem [shape: f32[16,384], index: 7, kind: output, shape index: {}]
  %s8 = sld [smem:[#allocation0]]
  $region46: #{generator_forward.1} parent=0
    _
  %s10 = ssub.s32 1, %s8
  %s11 = scalar_select 0, %s10, %s8
  $region1: #{generator_forward.1} parent=0
    #allocation2 [shape = 'u8[32768]{0}', space=vmem, size = 0x8000, scoped, tag = 'input window, operand 3, single buffered']
    #allocation3 [shape = 's32[1]{0}', space=sflag, size = 0x4, scoped, tag = 'scoped memory for generator_forward.1']
    #allocation4 [shape = 'u8[98304]{0}', space=vmem, size = 0x18000, scoped, tag = 'input window, operand 5, single buffered']
    #allocation5 [shape = 's32[1]{0}', space=sflag, size = 0x4, scoped, tag = 'scoped memory for generator_forward.1']
    %12 = vsyncpa [#allocation3], 0
    %13 = vsyncpa [#allocation5], 0
    // Predicated region
    $region2: #{generator_forward.1} parent=1 // pred_check
      _
    $region3: #{generator_forward.1} parent=1 // pred_check_branch
      %15 = sbr.rel (0) target = $region5
    $region4: #{generator_forward.1} parent=1 // pred_region
      _
    $region5: #{generator_forward.1} parent=1 // pred_fallthru
      _
    // Predicated region
    $region6: #{generator_forward.1} parent=1 // pred_check
      _
    $region7: #{generator_forward.1} parent=1 // pred_check_branch
      %17 = sbr.rel (0) target = $region9
    $region8: #{generator_forward.1} parent=1 // pred_region
      _
    $region9: #{generator_forward.1} parent=1 // pred_fallthru
      _
    // Predicated region
    $region10: #{generator_forward.1} parent=1 // pred_check
      _
    $region11: #{generator_forward.1} parent=1 // pred_check_branch
      %19 = sbr.rel (0) target = $region13
    $region12: #{generator_forward.1} parent=1 // pred_region
      _
    $region13: #{generator_forward.1} parent=1 // pred_fallthru
      _
    // Predicated region
    $region14: #{generator_forward.1} parent=1 // pred_check
      _
    $region15: #{generator_forward.1} parent=1 // pred_check_branch
      %21 = sbr.rel (0) target = $region17
    $region16: #{generator_forward.1} parent=1 // pred_region
      %23 = vsyncadd [#allocation3], 0
      %s24 = sshll.u32 %s3, 4
      %s25 = int_to_ptr.hbm [resolvable:$true] %s24
      %s26 = sshll.u32 [#allocation2], 4
      %s27 = int_to_ptr.vmem [resolvable:$true] %s26
      %32 = dma.hbm_to_vmem [thread:$0]  %s25, 1024, %s27, [#allocation3], 64, 64, 4
    $region17: #{generator_forward.1} parent=1 // pred_fallthru
      _
    // Predicated region
    $region18: #{generator_forward.1} parent=1 // pred_check
      _
    $region19: #{generator_forward.1} parent=1 // pred_check_branch
      %34 = sbr.rel (0) target = $region21
    $region20: #{generator_forward.1} parent=1 // pred_region
      _
    $region21: #{generator_forward.1} parent=1 // pred_fallthru
      _
    // Predicated region
    $region22: #{generator_forward.1} parent=1 // pred_check
      _
    $region23: #{generator_forward.1} parent=1 // pred_check_branch
      %36 = sbr.rel (0) target = $region25
    $region24: #{generator_forward.1} parent=1 // pred_region
      %38 = vsyncadd [#allocation5], 0
      %s39 = sshll.u32 %s5, 4
      %s40 = int_to_ptr.hbm [resolvable:$true] %s39
      %s41 = sshll.u32 [#allocation4], 4
      %s42 = int_to_ptr.vmem [resolvable:$true] %s41
      %47 = dma.hbm_to_vmem [thread:$0]  %s40, 3072, %s42, [#allocation5], 192, 192, 12
    $region25: #{generator_forward.1} parent=1 // pred_fallthru
      _
    // Predicated region
    $region26: #{generator_forward.1} parent=1 // pred_check
      _
    $region27: #{generator_forward.1} parent=1 // pred_check_branch
      %49 = sbr.rel (0) target = $region29
    $region28: #{generator_forward.1} parent=1 // pred_region
      _
    $region29: #{generator_forward.1} parent=1 // pred_fallthru
      _
    // Predicated region
    $region30: #{generator_forward.1} parent=1 // pred_check
      _
    $region31: #{generator_forward.1} parent=1 // pred_check_branch
      %51 = sbr.rel (0) target = $region33
    $region32: #{generator_forward.1} parent=1 // pred_region
      %53 = dma.done [#allocation3], 1024
    $region33: #{generator_forward.1} parent=1 // pred_fallthru
      _
    // Predicated region
    $region34: #{generator_forward.1} parent=1 // pred_check
      _
    $region35: #{generator_forward.1} parent=1 // pred_check_branch
      %55 = sbr.rel (0) target = $region37
    $region36: #{generator_forward.1} parent=1 // pred_region
      %57 = dma.done [#allocation5], 3072
    $region37: #{generator_forward.1} parent=1 // pred_fallthru
      _
    %v59 = vld [vmem:[%s0] sm:$0xf]
    %v60 = vld [vmem:[%s0 + $0x4] sm:$0xf]
    %v61 = vld [vmem:[%s1] sm:$0xf]
    %v62 = vld [vmem:[%s1 + $0x4] sm:$0xf]
    %v63 = vld [vmem:[%s2] sm:$0x1]
    %v65 = vperm.slane %v63, 0
    %v69 = vunpack.c.l.b16 %v59
    %v70 = vunpack.c.l.b16 %v60
    %v71 = vpack.c.b16 %v70, %v69
    %v74 = vunpack.c.l.b16 %v61
    %v75 = vunpack.c.l.b16 %v62
    %v76 = vpack.c.b16 %v75, %v74
    %vm78 = vcmask 130048
    %v80 = vsel %vm78, %v71, 0
    %82 = vmatpush.bf16.msra.mxu0 0
    %83 = vmatpush.bf16.msra.mxu0 0
    %84 = vmatpush.bf16.msra.mxu0 0
    %85 = vmatpush.bf16.msra.mxu0 0
    %86 = vmatpush.bf16.msra.mxu0 0
    %87 = vmatpush.bf16.msra.mxu0 0
    %88 = vmatpush.bf16.msra.mxu0 0
    %89 = vmatpush.bf16.msra.mxu0 %v76
    %90 = vmatmul.bf16.gmra.mxu0 %v80
    %v91 = vpop.f32.mrf.mxu0
    %v92 = vadd.f32 %v65, %v91
    %v93 = vpop.f32.mrf.mxu0
    %v94 = vadd.f32 %v65, %v93
    %95 = vdwg.mxu0
    %v96 = vtanh.pop %v92
    %v97 = vtanh.pop %v94
    %v98 = vpack.c.bf16 %v97, %v96
    %v99 = vld [vmem:[#allocation2] sm:$0xf]
    %v100 = vld [vmem:[#allocation2 + $0x4] sm:$0xf]
    %v101 = vld [vmem:[#allocation2 + $0x8] sm:$0xf]
    %v102 = vld [vmem:[#allocation2 + $0xc] sm:$0xf]
    %v103 = vld [vmem:[#allocation2 + $0x10] sm:$0xf]
    %v104 = vld [vmem:[#allocation2 + $0x14] sm:$0xf]
    %v105 = vld [vmem:[#allocation2 + $0x18] sm:$0xf]
    %v106 = vld [vmem:[#allocation2 + $0x1c] sm:$0xf]
    %v107 = vld [vmem:[#allocation2 + $0x20] sm:$0xf]
    %v108 = vld [vmem:[#allocation2 + $0x24] sm:$0xf]
    %v109 = vld [vmem:[#allocation2 + $0x28] sm:$0xf]
    %v110 = vld [vmem:[#allocation2 + $0x2c] sm:$0xf]
    %v111 = vld [vmem:[#allocation2 + $0x30] sm:$0xf]
    %v112 = vld [vmem:[#allocation2 + $0x34] sm:$0xf]
    %v113 = vld [vmem:[#allocation2 + $0x38] sm:$0xf]
    %v114 = vld [vmem:[#allocation2 + $0x3c] sm:$0xf]
    %v115 = vld [vmem:[%s4] sm:$0x1]
    %v117 = vperm.slane %v115, 0
    %v135 = vunpack.c.l.b16 %v99
    %v136 = vunpack.c.l.b16 %v100
    %v137 = vunpack.c.l.b16 %v101
    %v138 = vunpack.c.l.b16 %v102
    %v139 = vunpack.c.l.b16 %v103
    %v140 = vunpack.c.l.b16 %v104
    %v141 = vunpack.c.l.b16 %v105
    %v142 = vunpack.c.l.b16 %v106
    %v143 = vunpack.c.l.b16 %v107
    %v144 = vunpack.c.l.b16 %v108
    %v145 = vunpack.c.l.b16 %v109
    %v146 = vunpack.c.l.b16 %v110
    %v147 = vunpack.c.l.b16 %v111
    %v148 = vunpack.c.l.b16 %v112
    %v149 = vunpack.c.l.b16 %v113
    %v150 = vunpack.c.l.b16 %v114
    %v151 = vpack.c.b16 %v136, %v135
    %v152 = vpack.c.b16 %v138, %v137
    %v153 = vpack.c.b16 %v140, %v139
    %v154 = vpack.c.b16 %v142, %v141
    %v155 = vpack.c.b16 %v144, %v143
    %v156 = vpack.c.b16 %v146, %v145
    %v157 = vpack.c.b16 %v148, %v147
    %v158 = vpack.c.b16 %v150, %v149
    %167 = vmatpush.bf16.msra.mxu0 %v158
    %168 = vmatpush.bf16.msra.mxu0 %v157
    %169 = vmatpush.bf16.msra.mxu0 %v156
    %170 = vmatpush.bf16.msra.mxu0 %v155
    %171 = vmatpush.bf16.msra.mxu0 %v154
    %172 = vmatpush.bf16.msra.mxu0 %v153
    %173 = vmatpush.bf16.msra.mxu0 %v152
    %174 = vmatpush.bf16.msra.mxu0 %v151
    %175 = vmatmul.bf16.gmra.mxu0 %v98
    %v176 = vpop.f32.mrf.mxu0
    %v177 = vadd.f32 %v117, %v176
    %v178 = vpop.f32.mrf.mxu0
    %v179 = vadd.f32 %v117, %v178
    %180 = vdwg.mxu0
    %v181 = vtanh.pop %v177
    %v182 = vtanh.pop %v179
    %v183 = vpack.c.bf16 %v182, %v181
    %v184 = vld [vmem:[#allocation4] sm:$0xff]
    %v185 = vld [vmem:[#allocation4 + $0x8] sm:$0xf]
    %v186 = vld [vmem:[#allocation4 + $0xc] sm:$0xff]
    %v187 = vld [vmem:[#allocation4 + $0x14] sm:$0xf]
    %v188 = vld [vmem:[#allocation4 + $0x18] sm:$0xff]
    %v189 = vld [vmem:[#allocation4 + $0x20] sm:$0xf]
    %v190 = vld [vmem:[#allocation4 + $0x24] sm:$0xff]
    %v191 = vld [vmem:[#allocation4 + $0x2c] sm:$0xf]
    %v192 = vld [vmem:[#allocation4 + $0x30] sm:$0xff]
    %v193 = vld [vmem:[#allocation4 + $0x38] sm:$0xf]
    %v194 = vld [vmem:[#allocation4 + $0x3c] sm:$0xff]
    %v195 = vld [vmem:[#allocation4 + $0x44] sm:$0xf]
    %v196 = vld [vmem:[#allocation4 + $0x48] sm:$0xff]
    %v197 = vld [vmem:[#allocation4 + $0x50] sm:$0xf]
    %v198 = vld [vmem:[#allocation4 + $0x54] sm:$0xff]
    %v199 = vld [vmem:[#allocation4 + $0x5c] sm:$0xf]
    %v200 = vld [vmem:[#allocation4 + $0x60] sm:$0xff]
    %v201 = vld [vmem:[#allocation4 + $0x68] sm:$0xf]
    %v202 = vld [vmem:[#allocation4 + $0x6c] sm:$0xff]
    %v203 = vld [vmem:[#allocation4 + $0x74] sm:$0xf]
    %v204 = vld [vmem:[#allocation4 + $0x78] sm:$0xff]
    %v205 = vld [vmem:[#allocation4 + $0x80] sm:$0xf]
    %v206 = vld [vmem:[#allocation4 + $0x84] sm:$0xff]
    %v207 = vld [vmem:[#allocation4 + $0x8c] sm:$0xf]
    %v208 = vld [vmem:[#allocation4 + $0x90] sm:$0xff]
    %v209 = vld [vmem:[#allocation4 + $0x98] sm:$0xf]
    %v210 = vld [vmem:[#allocation4 + $0x9c] sm:$0xff]
    %v211 = vld [vmem:[#allocation4 + $0xa4] sm:$0xf]
    %v212 = vld [vmem:[#allocation4 + $0xa8] sm:$0xff]
    %v213 = vld [vmem:[#allocation4 + $0xb0] sm:$0xf]
    %v214 = vld [vmem:[#allocation4 + $0xb4] sm:$0xff]
    %v215 = vld [vmem:[#allocation4 + $0xbc] sm:$0xf]
    %v216 = vld [vmem:[%s6] sm:$0x7]
    %v218 = vperm.slane %v216, 0
    %v219 = vperm.slane %v216, 1
    %v220 = vperm.slane %v216, 2
    %v256 = vunpack.c.l.b16 %v184
    %v257 = vunpack.c.h.b16 %v184
    %v258 = vunpack.c.l.b16 %v185
    %v259 = vunpack.c.l.b16 %v186
    %v260 = vunpack.c.h.b16 %v186
    %v261 = vunpack.c.l.b16 %v187
    %v262 = vunpack.c.l.b16 %v188
    %v263 = vunpack.c.h.b16 %v188
    %v264 = vunpack.c.l.b16 %v189
    %v265 = vunpack.c.l.b16 %v190
    %v266 = vunpack.c.h.b16 %v190
    %v267 = vunpack.c.l.b16 %v191
    %v268 = vunpack.c.l.b16 %v192
    %v269 = vunpack.c.h.b16 %v192
    %v270 = vunpack.c.l.b16 %v193
    %v271 = vunpack.c.l.b16 %v194
    %v272 = vunpack.c.h.b16 %v194
    %v273 = vunpack.c.l.b16 %v195
    %v274 = vunpack.c.l.b16 %v196
    %v275 = vunpack.c.h.b16 %v196
    %v276 = vunpack.c.l.b16 %v197
    %v277 = vunpack.c.l.b16 %v198
    %v278 = vunpack.c.h.b16 %v198
    %v279 = vunpack.c.l.b16 %v199
    %v280 = vunpack.c.l.b16 %v200
    %v281 = vunpack.c.h.b16 %v200
    %v282 = vunpack.c.l.b16 %v201
    %v283 = vunpack.c.l.b16 %v202
    %v284 = vunpack.c.h.b16 %v202
    %v285 = vunpack.c.l.b16 %v203
    %v286 = vunpack.c.l.b16 %v204
    %v287 = vunpack.c.h.b16 %v204
    %v288 = vunpack.c.l.b16 %v205
    %v289 = vunpack.c.l.b16 %v206
    %v290 = vunpack.c.h.b16 %v206
    %v291 = vunpack.c.l.b16 %v207
    %v292 = vunpack.c.l.b16 %v208
    %v293 = vunpack.c.h.b16 %v208
    %v294 = vunpack.c.l.b16 %v209
    %v295 = vunpack.c.l.b16 %v210
    %v296 = vunpack.c.h.b16 %v210
    %v297 = vunpack.c.l.b16 %v211
    %v298 = vunpack.c.l.b16 %v212
    %v299 = vunpack.c.h.b16 %v212
    %v300 = vunpack.c.l.b16 %v213
    %v301 = vunpack.c.l.b16 %v214
    %v302 = vunpack.c.h.b16 %v214
    %v303 = vunpack.c.l.b16 %v215
    %v304 = vpack.c.b16 %v259, %v256
    %v305 = vpack.c.b16 %v260, %v257
    %v306 = vpack.c.b16 %v261, %v258
    %v307 = vpack.c.b16 %v265, %v262
    %v308 = vpack.c.b16 %v266, %v263
    %v309 = vpack.c.b16 %v267, %v264
    %v310 = vpack.c.b16 %v271, %v268
    %v311 = vpack.c.b16 %v272, %v269
    %v312 = vpack.c.b16 %v273, %v270
    %v313 = vpack.c.b16 %v277, %v274
    %v314 = vpack.c.b16 %v278, %v275
    %v315 = vpack.c.b16 %v279, %v276
    %v316 = vpack.c.b16 %v283, %v280
    %v317 = vpack.c.b16 %v284, %v281
    %v318 = vpack.c.b16 %v285, %v282
    %v319 = vpack.c.b16 %v289, %v286
    %v320 = vpack.c.b16 %v290, %v287
    %v321 = vpack.c.b16 %v291, %v288
    %v322 = vpack.c.b16 %v295, %v292
    %v323 = vpack.c.b16 %v296, %v293
    %v324 = vpack.c.b16 %v297, %v294
    %v325 = vpack.c.b16 %v301, %v298
    %v326 = vpack.c.b16 %v302, %v299
    %v327 = vpack.c.b16 %v303, %v300
    %352 = vmatpush.bf16.msra.mxu0 %v325
    %353 = vmatpush.bf16.msra.mxu0 %v322
    %354 = vmatpush.bf16.msra.mxu0 %v319
    %355 = vmatpush.bf16.msra.mxu0 %v316
    %356 = vmatpush.bf16.msra.mxu0 %v313
    %357 = vmatpush.bf16.msra.mxu0 %v310
    %358 = vmatpush.bf16.msra.mxu0 %v307
    %359 = vmatpush.bf16.msra.mxu0 %v304
    %360 = vmatmul.bf16.gmra.mxu0 %v183
    %v361 = vpop.f32.mrf.mxu0
    %v362 = vadd.f32 %v218, %v361
    %v363 = vpop.f32.mrf.mxu0
    %v364 = vadd.f32 %v218, %v363
    %365 = vdwg.mxu0
    %366 = vmatpush.bf16.msra.mxu0 %v326
    %367 = vmatpush.bf16.msra.mxu0 %v323
    %368 = vmatpush.bf16.msra.mxu0 %v320
    %369 = vmatpush.bf16.msra.mxu0 %v317
    %370 = vmatpush.bf16.msra.mxu0 %v314
    %371 = vmatpush.bf16.msra.mxu0 %v311
    %372 = vmatpush.bf16.msra.mxu0 %v308
    %373 = vmatpush.bf16.msra.mxu0 %v305
    %374 = vmatmul.bf16.gmra.mxu0 %v183
    %v375 = vpop.f32.mrf.mxu0
    %v376 = vadd.f32 %v219, %v375
    %v377 = vpop.f32.mrf.mxu0
    %v378 = vadd.f32 %v219, %v377
    %379 = vdwg.mxu0
    %380 = vmatpush.bf16.msra.mxu0 %v327
    %381 = vmatpush.bf16.msra.mxu0 %v324
    %382 = vmatpush.bf16.msra.mxu0 %v321
    %383 = vmatpush.bf16.msra.mxu0 %v318
    %384 = vmatpush.bf16.msra.mxu0 %v315
    %385 = vmatpush.bf16.msra.mxu0 %v312
    %386 = vmatpush.bf16.msra.mxu0 %v309
    %387 = vmatpush.bf16.msra.mxu0 %v306
    %388 = vmatmul.bf16.gmra.mxu0 %v183
    %v389 = vpop.f32.mrf.mxu0
    %v390 = vadd.f32 %v220, %v389
    %v391 = vpop.f32.mrf.mxu0
    %v392 = vadd.f32 %v220, %v391
    %393 = vdwg.mxu0
    %394 = vst [vmem:[%s7] sm:$0xff] %v362
    %395 = vst [vmem:[%s7 + $0x8] sm:$0xff] %v376
    %396 = vst [vmem:[%s7 + $0x10] sm:$0xff] %v390
    %397 = vst [vmem:[%s7 + $0x18] sm:$0xff] %v364
    %398 = vst [vmem:[%s7 + $0x20] sm:$0xff] %v378
    %399 = vst [vmem:[%s7 + $0x28] sm:$0xff] %v392
    // Predicated region
    $region38: #{generator_forward.1} parent=1 // pred_check
      _
    $region39: #{generator_forward.1} parent=1 // pred_check_branch
      %401 = sbr.rel (0) target = $region41
    $region40: #{generator_forward.1} parent=1 // pred_region
      _
    $region41: #{generator_forward.1} parent=1 // pred_fallthru
      _
    // Predicated region
    $region42: #{generator_forward.1} parent=1 // pred_check
      _
    $region43: #{generator_forward.1} parent=1 // pred_check_branch
      %403 = sbr.rel (0) target = $region45
    $region44: #{generator_forward.1} parent=1 // pred_region
      _
    $region45: #{generator_forward.1} parent=1 // pred_fallthru
      _
    %404 = vsyncpa [#allocation3], 1
    %405 = vsyncpa [#allocation5], 1

</llo_original>
